<compile_context>
chip_gen: v5e
topology: v5e:2x2
jax: 0.10.0
libtpu: 0.0.40
codegen_flags: <defaults>
</compile_context>

<pallas_src>
import functools

import jax
import jax.numpy as jnp
from jax.experimental import pallas as pl
from jax.experimental.pallas import tpu as pltpu

_NEG_PAD = -1e30  # large finite negative used for the masked class gather


def _round_up(x, m):
    return ((x + m - 1) // m) * m


def _pow_gamma(q, gamma):
    """q ** gamma, trace-time specialized for (half-)integer gamma.

    jnp.power lowers to exp(gamma * log(q)) (two EUP ops); for gamma = k/2 we use
    integer multiplies plus at most one sqrt instead.
    """
    twog = float(gamma) * 2.0
    if twog.is_integer() and 0 <= twog <= 16:
        k = int(round(twog))
        out = jnp.ones_like(q)
        for _ in range(k // 2):
            out = out * q
        if k % 2 == 1:
            out = out * jnp.sqrt(q)
        return out
    return jnp.power(q, gamma)


def _focal_loss_kernel(x_ref, t_ref, at_ref, o_ref, *, gamma, n_rows, reduce_out):
    tile_n, c = x_ref.shape

    # Upcast inside the kernel so bf16 logits travel through the DMA at half the bytes.
    x = x_ref[...].astype(jnp.float32)          # (T, C)
    t = t_ref[...]                              # (T, 1) int32
    a_t = at_ref[...].astype(jnp.float32)       # (T, 1) alpha[target]

    # Stable log-sum-exp over the class (lane) axis.
    m = jnp.max(x, axis=-1, keepdims=True)
    z = x - m
    lse = jnp.log(jnp.sum(jnp.exp(z), axis=-1, keepdims=True))   # (T, 1)

    # Gather z[target] via a masked max (exactly one lane matches per valid row).
    cls = jax.lax.broadcasted_iota(jnp.int32, (tile_n, c), 1)
    z_t = jnp.max(jnp.where(cls == t, z, _NEG_PAD), axis=-1, keepdims=True)

    # cross_entropy(inputs, targets, reduction='none') == lse - z[target]
    ce = lse - z_t
    pt = jnp.exp(-ce)
    q = jnp.maximum(1.0 - pt, 0.0)              # clamp: pt can exceed 1 by a ULP
    loss = a_t * _pow_gamma(q, gamma) * ce      # (T, 1)

    # Rows past n_rows (partial final block) hold unspecified data; select them to 0
    # (jnp.where, not multiply, so NaN garbage cannot leak through).
    row = jax.lax.broadcasted_iota(jnp.int32, (tile_n, 1), 0) + pl.program_id(0) * tile_n
    loss = jnp.where(row < n_rows, loss, 0.0)

    if reduce_out:
        # One scalar partial sum per grid step.
        o_ref[...] = jnp.sum(loss, axis=0, keepdims=True).reshape(1, 1, 1)
    else:
        # Lane-dense per-row output (sublane column -> lane row via XLU, which has slack).
        o_ref[...] = loss.reshape(1, 1, tile_n)


def focal_loss(inputs, targets, alpha, gamma=2.5, reduce=True, tile_n=None):
    """Matches FocalLoss(alpha, gamma, logits=False, reduce).forward(inputs, targets).

    inputs: (N, C) float logits; targets: (N,) int class ids; alpha: (C,) float weights.
    """
    # TODO(synk): logits=True (elementwise binary_cross_entropy_with_logits) branch of the
    # PyTorch module is not implemented; only the default logits=False path is.
    n, c = inputs.shape

    # VMEM lane footprint per row (class axis pads to 128 lanes in VMEM, not in HBM).
    cp_layout = _round_up(c, 128)

    if tile_n is None:
        # ~4 MiB f32 footprint per logits block; double-buffered input + in-kernel f32
        # intermediates then stay comfortably under the 32 MiB scoped VMEM limit (v7x-safe).
        budget_rows = max(8, ((4 * 1024 * 1024) // (cp_layout * 4)) // 8 * 8)
        cap = min(2048, budget_rows)
        tile_n = n if n <= cap else cap
        if n >= 16:
            # At least 2 grid steps so the "parallel" axis feeds both v7x TensorCores.
            tile_n = min(tile_n, _round_up((n + 1) // 2, 8))
    else:
        tile_n = max(1, int(tile_n))
        if tile_n >= n:
            tile_n = n
        else:
            tile_n = max(8, (tile_n // 8) * 8)
            if tile_n >= n:
                tile_n = n
    num_tiles = pl.cdiv(n, tile_n)

    x = inputs                                        # no pad, no dtype cast
    t = targets.reshape(n, 1).astype(jnp.int32)
    a_t = alpha.astype(jnp.float32)[targets].reshape(n, 1)   # tiny XLA gather

    if reduce:
        out_shape = jax.ShapeDtypeStruct((num_tiles, 1, 1), jnp.float32)
        out_spec = pl.BlockSpec((1, 1, 1), lambda i: (i, 0, 0))
    else:
        out_shape = jax.ShapeDtypeStruct((num_tiles, 1, tile_n), jnp.float32)
        out_spec = pl.BlockSpec((1, 1, tile_n), lambda i: (i, 0, 0))

    out = pl.pallas_call(
        functools.partial(_focal_loss_kernel, gamma=gamma, n_rows=n, reduce_out=reduce),
        out_shape=out_shape,
        grid=(num_tiles,),
        in_specs=[
            pl.BlockSpec((tile_n, c), lambda i: (i, 0)),   # logits tile (full class dim)
            pl.BlockSpec((tile_n, 1), lambda i: (i, 0)),   # targets tile
            pl.BlockSpec((tile_n, 1), lambda i: (i, 0)),   # alpha[targets] tile
        ],
        out_specs=out_spec,
        compiler_params=pltpu.CompilerParams(
            dimension_semantics=("parallel",),
            vmem_limit_bytes=32 * 1024 * 1024,
        ),
    )(x, t, a_t)

    if reduce:
        return jnp.sum(out) / jnp.float32(n)
    return out.reshape(num_tiles * tile_n)[:n]


def focal_loss_ref(inputs, targets, alpha, gamma=2.5, reduce=True):
    """Pure-JAX reference mirroring the PyTorch forward (logits=False)."""
    logp = jax.nn.log_softmax(inputs, axis=-1)
    ce = -jnp.take_along_axis(logp, targets[:, None], axis=-1)[:, 0]
    pt = jnp.exp(-ce)
    f_loss = alpha[targets] * (1.0 - pt) ** gamma * ce
    return jnp.mean(f_loss) if reduce else f_loss


if __name__ == "__main__":
    key = jax.random.PRNGKey(0)
    k1, k2, k3 = jax.random.split(key, 3)

    # Small shapes consistent with the detection-head loss: N rows of logits over C classes.
    N, C = 8, 16
    inputs = jax.random.normal(k1, (N, C), dtype=jnp.float32)
    targets = jax.random.randint(k2, (N,), 0, C, dtype=jnp.int32)
    alpha = jax.random.uniform(k3, (C,), dtype=jnp.float32, minval=0.25, maxval=1.0)

    out = focal_loss(inputs, targets, alpha, gamma=2.5)
    jax.block_until_ready(out)
    ref = focal_loss_ref(inputs, targets, alpha, gamma=2.5)
    assert jnp.allclose(out, ref, rtol=1e-5, atol=1e-6), (out, ref)

    # Multi-tile batch grid (auto tile), ragged N/C with NO padding, bf16 logits through DMA.
    N2, C2 = 300, 21
    k4, k5, k6 = jax.random.split(k3, 3)
    inputs2 = jax.random.normal(k4, (N2, C2), dtype=jnp.bfloat16)
    targets2 = jax.random.randint(k5, (N2,), 0, C2, dtype=jnp.int32)
    alpha2 = jax.random.uniform(k6, (C2,), dtype=jnp.float32, minval=0.25, maxval=1.0)

    out2 = focal_loss(inputs2, targets2, alpha2, gamma=2.5)
    jax.block_until_ready(out2)
    ref2 = focal_loss_ref(inputs2.astype(jnp.float32), targets2, alpha2, gamma=2.5)
    assert jnp.allclose(out2, ref2, rtol=1e-4, atol=1e-5), (out2, ref2)

    # reduce=False path: lane-dense per-row output, explicit tile_n with a partial last block.
    out3 = focal_loss(inputs2, targets2, alpha2, gamma=2.5, reduce=False, tile_n=64)
    jax.block_until_ready(out3)
    ref3 = focal_loss_ref(inputs2.astype(jnp.float32), targets2, alpha2, gamma=2.5, reduce=False)
    assert out3.shape == ref3.shape
    assert jnp.allclose(out3, ref3, rtol=1e-4, atol=1e-5), (out3, ref3)

    print("KERNEL_OK")
</pallas_src>

<mosaic_0001>
module attributes {stable_mosaic.version = 11 : i64} {
  func.func @_focal_loss_kernel(%arg0: i32, %arg1: memref<8x16xf32, #tpu.memory_space<vmem>>, %arg2: memref<8x1xi32, #tpu.memory_space<vmem>>, %arg3: memref<8x1xf32, #tpu.memory_space<vmem>>, %arg4: memref<1x1x1xf32, #tpu.memory_space<vmem>>) attributes {dimension_semantics = [#tpu.dimension_semantics<parallel>], iteration_bounds = array<i64: 1>, scalar_prefetch = 0 : i64, scratch_operands = 0 : i64, tpu.core_type = #tpu.core_type<tc>, window_params = [{transform_indices = @transform_0, window_bounds = array<i64: 8, 16>}, {transform_indices = @transform_1, window_bounds = array<i64: 8, 1>}, {transform_indices = @transform_2, window_bounds = array<i64: 8, 1>}, {transform_indices = @transform_3, window_bounds = array<i64: 1, 1, 1>}]} {
    %c0 = arith.constant 0 : index
    %c0_0 = arith.constant 0 : index
    %0 = vector.load %arg1[%c0, %c0_0] : memref<8x16xf32, #tpu.memory_space<vmem>>, vector<8x16xf32>
    %c0_1 = arith.constant 0 : index
    %c0_2 = arith.constant 0 : index
    %1 = vector.load %arg2[%c0_1, %c0_2] : memref<8x1xi32, #tpu.memory_space<vmem>>, vector<8x1xi32>
    %c0_3 = arith.constant 0 : index
    %c0_4 = arith.constant 0 : index
    %2 = vector.load %arg3[%c0_3, %c0_4] : memref<8x1xf32, #tpu.memory_space<vmem>>, vector<8x1xf32>
    %cst = arith.constant dense<0xFF800000> : vector<8xf32>
    %3 = vector.multi_reduction <maximumf>, %0, %cst [1] : vector<8x16xf32> to vector<8xf32>
    %4 = vector.shape_cast %3 : vector<8xf32> to vector<8x1xf32>
    %5 = vector.broadcast %4 : vector<8x1xf32> to vector<8x16xf32>
    %6 = arith.subf %0, %5 : vector<8x16xf32>
    %7 = math.exp %6 : vector<8x16xf32>
    %cst_5 = arith.constant dense<0.000000e+00> : vector<8xf32>
    %8 = vector.multi_reduction <add>, %7, %cst_5 [1] : vector<8x16xf32> to vector<8xf32>
    %9 = vector.shape_cast %8 : vector<8xf32> to vector<8x1xf32>
    %10 = math.log %9 : vector<8x1xf32>
    %11 = tpu.iota {dimensions = array<i32: 1>} : vector<8x16xi32>
    %12 = vector.broadcast %1 : vector<8x1xi32> to vector<8x16xi32>
    %13 = arith.cmpi eq, %11, %12 : vector<8x16xi32>
    %cst_6 = arith.constant -1.000000e+30 : f32
    %14 = vector.broadcast %cst_6 : f32 to vector<8x16xf32>
    %15 = arith.select %13, %6, %14 : vector<8x16xi1>, vector<8x16xf32>
    %cst_7 = arith.constant dense<0xFF800000> : vector<8xf32>
    %16 = vector.multi_reduction <maximumf>, %15, %cst_7 [1] : vector<8x16xf32> to vector<8xf32>
    %17 = vector.shape_cast %16 : vector<8xf32> to vector<8x1xf32>
    %18 = arith.subf %10, %17 : vector<8x1xf32>
    %cst_8 = arith.constant 0.000000e+00 : f32
    %19 = vector.broadcast %cst_8 : f32 to vector<8x1xf32>
    %20 = arith.subf %19, %18 : vector<8x1xf32>
    %21 = math.exp %20 : vector<8x1xf32>
    %cst_9 = arith.constant 1.000000e+00 : f32
    %22 = vector.broadcast %cst_9 : f32 to vector<8x1xf32>
    %23 = arith.subf %22, %21 : vector<8x1xf32>
    %cst_10 = arith.constant 0.000000e+00 : f32
    %24 = vector.broadcast %cst_10 : f32 to vector<8x1xf32>
    %25 = arith.maximumf %23, %24 : vector<8x1xf32>
    %cst_11 = arith.constant 1.000000e+00 : f32
    %26 = vector.broadcast %cst_11 : f32 to vector<8x1xf32>
    %27 = arith.mulf %26, %25 : vector<8x1xf32>
    %28 = arith.mulf %27, %25 : vector<8x1xf32>
    %29 = math.sqrt %25 : vector<8x1xf32>
    %30 = arith.mulf %28, %29 : vector<8x1xf32>
    %31 = arith.mulf %2, %30 : vector<8x1xf32>
    %32 = arith.mulf %31, %18 : vector<8x1xf32>
    %33 = tpu.iota {dimensions = array<i32: 0>} : vector<8x1xi32>
    %c8_i32 = arith.constant 8 : i32
    %34 = arith.muli %arg0, %c8_i32 : i32
    %35 = vector.broadcast %34 : i32 to vector<8x1xi32>
    %36 = arith.addi %33, %35 : vector<8x1xi32>
    %c8_i32_12 = arith.constant 8 : i32
    %37 = vector.broadcast %c8_i32_12 : i32 to vector<8x1xi32>
    %38 = arith.cmpi slt, %36, %37 : vector<8x1xi32>
    %cst_13 = arith.constant 0.000000e+00 : f32
    %39 = vector.broadcast %cst_13 : f32 to vector<8x1xf32>
    %40 = arith.select %38, %32, %39 : vector<8x1xi1>, vector<8x1xf32>
    %cst_14 = arith.constant dense<0.000000e+00> : vector<1xf32>
    %41 = vector.multi_reduction <add>, %40, %cst_14 [0] : vector<8x1xf32> to vector<1xf32>
    %42 = vector.shape_cast %41 : vector<1xf32> to vector<1x1xf32>
    %43 = vector.shape_cast %42 : vector<1x1xf32> to vector<1x1x1xf32>
    %c0_15 = arith.constant 0 : index
    %c0_16 = arith.constant 0 : index
    %c0_17 = arith.constant 0 : index
    %44 = vector.load %arg4[%c0_15, %c0_16, %c0_17] : memref<1x1x1xf32, #tpu.memory_space<vmem>>, vector<1x1x1xf32>
    tpu.vector_store %arg4[%c0_15, %c0_16, %c0_17], %43 {strides = array<i32>} : memref<1x1x1xf32, #tpu.memory_space<vmem>>, vector<1x1x1xf32>,
    return
  }
  func.func @transform_0(%arg0: i32) -> (i32, i32) {
    %c0_i32 = arith.constant 0 : i32
    %c0_i32_0 = arith.constant 0 : i32
    return %arg0, %c0_i32 : i32, i32
  }
  func.func @transform_1(%arg0: i32) -> (i32, i32) {
    %c0_i32 = arith.constant 0 : i32
    %c0_i32_0 = arith.constant 0 : i32
    return %arg0, %c0_i32 : i32, i32
  }
  func.func @transform_2(%arg0: i32) -> (i32, i32) {
    %c0_i32 = arith.constant 0 : i32
    %c0_i32_0 = arith.constant 0 : i32
    return %arg0, %c0_i32 : i32, i32
  }
  func.func @transform_3(%arg0: i32) -> (i32, i32, i32) {
    %c0_i32 = arith.constant 0 : i32
    %c0_i32_0 = arith.constant 0 : i32
    %c0_i32_1 = arith.constant 0 : i32
    return %arg0, %c0_i32, %c0_i32_0 : i32, i32, i32
  }
}

</mosaic_0001>

<llo_original>
// kernel: tpu_custom_call.1
$region0: #{tpu_custom_call.1}
  #allocation0 [shape = 'u32[]', space=smem, size = 0x4, offset = 0x4, fixed_abs, tag = 'smem constant byte address 0x4 - core index']
  #allocation1 [shape = 'u32[72,128]{1,0:T(1,128)}', space=vmem, size = 0x9000, scoped, tag = 'internal scratch']
  %s0 = inlined_call_operand.vmem [shape: f32[8,16], index: 0, kind: input, shape index: {}]
  %s1 = inlined_call_operand.vmem [shape: s32[8,1], index: 1, kind: input, shape index: {}]
  %s2 = inlined_call_operand.vmem [shape: f32[8,1], index: 2, kind: input, shape index: {}]
  %s3 = inlined_call_operand.hbm [shape: f32[1,1,1], index: 3, kind: output, shape index: {}]
  %s4 = sld [smem:[#allocation0]]
  $region22: #{tpu_custom_call.1} parent=0
    _
  %s6 = ssub.s32 1, %s4
  %s7 = scalar_select 0, %s6, %s4
  $region1: #{tpu_custom_call.1} parent=0
    #allocation2 [shape = 'u8[512]{0}', space=vmem, size = 0x400, scoped, tag = 'output window, operand 0, single buffered']
    #allocation3 [shape = 's32[1]{0}', space=sflag, size = 0x4, scoped, tag = 'scoped memory for tpu_custom_call.1']
    %8 = vsyncpa [#allocation3], 0
    // Predicated region
    $region2: #{tpu_custom_call.1} parent=1 // pred_check
      _
    $region3: #{tpu_custom_call.1} parent=1 // pred_check_branch
      %10 = sbr.rel (0) target = $region5
    $region4: #{tpu_custom_call.1} parent=1 // pred_region
      _
    $region5: #{tpu_custom_call.1} parent=1 // pred_fallthru
      _
    // Predicated region
    $region6: #{tpu_custom_call.1} parent=1 // pred_check
      _
    $region7: #{tpu_custom_call.1} parent=1 // pred_check_branch
      %12 = sbr.rel (0) target = $region9
    $region8: #{tpu_custom_call.1} parent=1 // pred_region
      _
    $region9: #{tpu_custom_call.1} parent=1 // pred_fallthru
      _
    // Predicated region
    $region10: #{tpu_custom_call.1} parent=1 // pred_check
      _
    $region11: #{tpu_custom_call.1} parent=1 // pred_check_branch
      %14 = sbr.rel (0) target = $region13
    $region12: #{tpu_custom_call.1} parent=1 // pred_region
      _
    $region13: #{tpu_custom_call.1} parent=1 // pred_fallthru
      _
    %v15 = vld [vmem:[%s0] sm:$0xff]
    %v16 = vld [vmem:[%s1] sm:$0xff]
    %v17 = vld [vmem:[%s2] sm:$0xff]
    %vm18 = vcmask 130048
    %v19 = vsel %vm18, %v15, -inf
    %20 = vmax.xlane.f32.xlu0 %v19
    %v21 = vpop.xlane.xlu0 %20
    %v22 = vsub.f32 %v15, %v21
    %v23 = vmul.f32 %v22, 1.442695
    %v24 = vpow.pop %v23
    %v25 = vsel %vm18, %v24, 0.0
    %26 = vadd.xlane.f32.xlu0 %v25
    %v27 = vpop.xlane.xlu0 %26
    %v28 = vlog2.pop %v27
    %v29 = vmul.f32 %v28, 0.6931472
    %v30 = vlaneseq
    %v31 = vand.u32 %v30, 127
    %32 = vset.pattern.permute.xlu0 0
    %33 = vperm.xlu0 %32, %v16
    %v34 = vpop.permute.xlu0 %33
    %vm35 = vcmp.eq.s32.totalorder %v31, %v34
    %v36 = vsel %vm35, %v22, -1e+30
    %v37 = vsel %vm18, %v36, -inf
    %38 = vmax.xlane.f32.xlu0 %v37
    %v39 = vpop.xlane.xlu0 %38
    %v40 = vsub.f32 %v29, %v39
    %v41 = vsub.f32 0.0, %v40
    %v42 = vmul.f32 %v41, 1.442695
    %v43 = vpow.pop %v42
    %v44 = vsub.f32 1.0, %v43
    %v45 = vmax.f32 %v44, 0.0
    %v46 = vmul.f32 %v45, %v45
    %v47 = vrsqrt.pop %v45
    %v48 = vmul.f32 %v47, %v45
    %v49 = vmul.f32 %v48, %v47
    %v50 = vmul.f32 0.5, %v49
    %v51 = vsub.f32 1.5, %v50
    %v52 = vmul.f32 %v47, %v51
    %v53 = vmul.f32 %v45, %v52
    %vm54 = vcmp.eq.f32.partialorder %v45, inf
    %v55 = vsel %vm54, %v45, %v53
    %vm56 = vcmp.eq.f32.partialorder %v45, 0.0
    %v57 = vand.u32 %v45, 2147483648
    %v58 = vsel %vm56, %v57, %v55
    %v59 = vmul.f32 %v46, %v58
    %v60 = vmul.f32 %v17, %v59
    %v61 = vmul.f32 %v60, %v40
    %v62 = vlaneseq
    %v63 = vshrl.u32 %v62, 7
    %s64 = smul.u32 0, 8
    %v65 = vstv %s64
    %v66 = vadd.s32 %v63, %v65
    %vm67 = vcmp.lt.s32.totalorder %v66, 8
    %v68 = vsel %vm67, %v61, 0.0
    %vm69 = vcmask 7168
    %v70 = vsel %vm69, %v68, 0.0
    %v71 = vrot.slane %v70, 4
    %v72 = vadd.f32 %v70, %v71
    %v73 = vrot.slane %v72, 2
    %v74 = vadd.f32 %v72, %v73
    %v75 = vrot.slane %v74, 1
    %v76 = vadd.f32 %v74, %v75
    %vm77 = vcmask 0
    %78 = vst.msk [vmem:[#allocation2] sm:$0x1] %vm77, %v76
    // Predicated region
    $region14: #{tpu_custom_call.1} parent=1 // pred_check
      _
    $region15: #{tpu_custom_call.1} parent=1 // pred_check_branch
      %80 = sbr.rel (0) target = $region17
    $region16: #{tpu_custom_call.1} parent=1 // pred_region
      %82 = vsyncadd [#allocation3], 0
      %s84 = sshll.u32 [#allocation2], 4
      %s85 = int_to_ptr.vmem [resolvable:$true] %s84
      %s86 = sshll.u32 %s3, 4
      %s87 = int_to_ptr.hbm [resolvable:$true] %s86
      %89 = dma.vmem_to_hbm [thread:$0]  %s85, 16, %s87, [#allocation3]
    $region17: #{tpu_custom_call.1} parent=1 // pred_fallthru
      _
    // Predicated region
    $region18: #{tpu_custom_call.1} parent=1 // pred_check
      _
    $region19: #{tpu_custom_call.1} parent=1 // pred_check_branch
      %91 = sbr.rel (0) target = $region21
    $region20: #{tpu_custom_call.1} parent=1 // pred_region
      %93 = dma.done [#allocation3], 16
    $region21: #{tpu_custom_call.1} parent=1 // pred_fallthru
      _
    %94 = vsyncpa [#allocation3], 1

</llo_original>
